<compile_context>
chip_gen: v7x
topology: tpu7x:2x2x1
jax: 0.10.0
libtpu: 0.0.40
codegen_flags: <defaults>
</compile_context>

<pallas_src>
import functools

import jax
import jax.numpy as jnp
from jax.experimental import pallas as pl
from jax.experimental.pallas import tpu as pltpu


# --------------------------------------------------------------------------
# Chip-aware sizing helpers
# --------------------------------------------------------------------------

@functools.lru_cache(maxsize=1)
def _tpu_chip_info():
    """Best-effort (vmem_capacity_bytes, tensorcores_per_chip) with safe fallbacks."""
    vmem_bytes = 128 << 20          # v5e / v6e physical VMEM
    n_tc = 1                        # v5e / v6e: single TensorCore per chip
    try:
        info = pltpu.get_tpu_info()
        v = getattr(info, "vmem_capacity_bytes", None)
        if v:
            vmem_bytes = int(v)
    except Exception:
        pass
    try:
        kind = jax.devices()[0].device_kind.lower()
        if ("7x" in kind) or ("v7" in kind) or ("tpu7" in kind):
            n_tc = 2                            # v7x: 2 TensorCores / chip
            vmem_bytes = min(vmem_bytes, 64 << 20)
    except Exception:
        pass
    return vmem_bytes, n_tc


def _block_budget_bytes(vmem_bytes):
    # ~4 MiB blocks on v7x (64 MiB VMEM), ~8 MiB on the 128 MiB chips.
    return (4 << 20) if vmem_bytes <= (64 << 20) else (8 << 20)


def _choose_block_batch(B, per_image_bytes, block_budget, n_tc):
    bb = max(1, block_budget // max(per_image_bytes, 1))
    bb = min(bb, B)
    if n_tc >= 2 and B >= 2:
        # Only split the grid on multi-TensorCore chips (v7x).  On the
        # single-TC v5e/v6e a split is pure per-step overhead / smaller DMAs.
        bb = min(bb, pl.cdiv(B, n_tc))
    return int(max(bb, 1))


def _vmem_limit_bytes(block_bytes, extra_bytes, vmem_bytes):
    # 2x double-buffered input block + 2x output block + small operands + slack,
    # floored at the 32 MiB scoped default and capped below physical VMEM.
    need = 4 * block_bytes + extra_bytes + (2 << 20)
    limit = max(32 << 20, need)
    return int(min(limit, vmem_bytes - (8 << 20)))


# --------------------------------------------------------------------------
# Kernels
# --------------------------------------------------------------------------

def _ca_fused_kernel(x_ref, w1t_ref, w2t_ref, o_ref):
    # x_ref block: (BB, C, HWp); w1t_ref: (C, Cr) == (w1/HW).T; w2t_ref: (Cr, C).
    # Global average pool: spatial sum (XLU); the 1/HW lives in w1t.  The f32
    # widening is fused into the reduction (no full-block f32 temp for bf16).
    pooled = jnp.sum(x_ref[...], axis=-1, dtype=jnp.float32)           # (BB, C)

    # conv_du: 1x1 conv -> ReLU -> 1x1 conv -> Sigmoid, in f32 on the MXU.
    h = jnp.maximum(
        jnp.dot(pooled, w1t_ref[...], preferred_element_type=jnp.float32), 0.0)
    y = jax.nn.sigmoid(
        jnp.dot(h, w2t_ref[...], preferred_element_type=jnp.float32))  # (BB, C)

    # Channel-wise rescale broadcast over the spatial (lane) axis, in the
    # input dtype (halves VALU/vreg traffic for bf16; sigmoid is in [0,1]).
    x = x_ref[...]
    o_ref[...] = (x * y.astype(x.dtype)[:, :, None]).astype(o_ref.dtype)


def _ca_scale_kernel(x_ref, y_ref, o_ref):
    # x_ref block: (1, C, hw_tile); y_ref block: (1, C, 1) precomputed gates.
    x = x_ref[...]
    o_ref[...] = (x * y_ref[...].astype(x.dtype)).astype(o_ref.dtype)


# --------------------------------------------------------------------------
# Wrappers
# --------------------------------------------------------------------------

def _ca_fused(xf, w1t, w2t, *, alias_input):
    B, C, HWp = xf.shape
    Cr = w1t.shape[1]
    itemsize = jnp.dtype(xf.dtype).itemsize
    vmem_bytes, n_tc = _tpu_chip_info()
    budget = _block_budget_bytes(vmem_bytes)

    per_image = C * HWp * itemsize
    bb = _choose_block_batch(B, per_image, budget, n_tc)
    block_bytes = bb * per_image
    weight_bytes = 2 * C * Cr * 4

    cost = pl.CostEstimate(
        flops=int(B * (2 * C * HWp + 4 * C * Cr)),
        transcendentals=int(B * C),
        bytes_accessed=int(2 * B * C * HWp * itemsize + 2 * weight_bytes),
    )

    return pl.pallas_call(
        _ca_fused_kernel,
        out_shape=jax.ShapeDtypeStruct((B, C, HWp), xf.dtype),
        grid=(pl.cdiv(B, bb),),
        in_specs=[
            pl.BlockSpec((bb, C, HWp), lambda b: (b, 0, 0)),   # batched x slab
            pl.BlockSpec((C, Cr), lambda b: (0, 0)),           # (w1/HW).T
            pl.BlockSpec((Cr, C), lambda b: (0, 0)),           # w2.T
        ],
        out_specs=pl.BlockSpec((bb, C, HWp), lambda b: (b, 0, 0)),
        compiler_params=pltpu.CompilerParams(
            dimension_semantics=("parallel",),
            vmem_limit_bytes=_vmem_limit_bytes(block_bytes, weight_bytes, vmem_bytes),
        ),
        cost_estimate=cost,
        # Opt-in: halves HBM footprint when x is dead after this op.
        input_output_aliases={0: 0} if alias_input else {},
    )(xf, w1t, w2t)


def _ca_two_pass(xf, w1t, w2t):
    """Fallback for images whose (C, HW) slab exceeds the block budget."""
    B, C, HWp = xf.shape
    itemsize = jnp.dtype(xf.dtype).itemsize
    vmem_bytes, _ = _tpu_chip_info()
    budget = _block_budget_bytes(vmem_bytes)

    # Pass A: pool + conv_du on the pooled (B, C) vectors.  Tiny compute, so
    # plain XLA is fine here; the bandwidth-heavy rescale below is Pallas.
    # (The extra read of x for the pool costs ~1.5x traffic only in this
    #  fallback, still far better than a VMEM OOM or a half-idle v7x chip.)
    pooled = jnp.sum(xf, axis=-1, dtype=jnp.float32)        # (B, C), 1/HW folded in w1t
    h = jnp.maximum(pooled @ w1t, 0.0)                       # (B, Cr)
    y = jax.nn.sigmoid(h @ w2t)[:, :, None]                  # (B, C, 1) f32 gates

    # Pass B: rescale, tiled over (batch, spatial tiles); both axes parallel so
    # a B=1 input still gives both v7x TensorCores work.
    max_lanes = max(128, (budget // max(C * itemsize, 1)) // 128 * 128)
    hw_tile = int(min(HWp, max_lanes))
    block_bytes = C * hw_tile * itemsize
    # TODO(synk): if C alone is so large that (1, C, 128) exceeds the VMEM
    # budget, a channel-tiled variant of this pass would be needed.

    cost = pl.CostEstimate(
        flops=int(B * C * HWp),
        transcendentals=0,
        bytes_accessed=int(2 * B * C * HWp * itemsize),
    )

    return pl.pallas_call(
        _ca_scale_kernel,
        out_shape=jax.ShapeDtypeStruct((B, C, HWp), xf.dtype),
        grid=(B, pl.cdiv(HWp, hw_tile)),
        in_specs=[
            pl.BlockSpec((1, C, hw_tile), lambda b, t: (b, 0, t)),
            pl.BlockSpec((1, C, 1), lambda b, t: (b, 0, 0)),
        ],
        out_specs=pl.BlockSpec((1, C, hw_tile), lambda b, t: (b, 0, t)),
        compiler_params=pltpu.CompilerParams(
            dimension_semantics=("parallel", "parallel"),
            vmem_limit_bytes=_vmem_limit_bytes(block_bytes, C * 4, vmem_bytes),
        ),
        cost_estimate=cost,
    )(xf, y)


def ca_layer(x, w1, w2, *, alias_input=False, force_two_pass=False):
    """CALayer.forward.  x: (B, C, H, W); w1: (C//r, C); w2: (C, C//r)."""
    B, C, H, W = x.shape
    HW = H * W
    itemsize = jnp.dtype(x.dtype).itemsize

    # Keep the spatial (lane) axis a multiple of 128 so output stores are
    # full-width unmasked vst's.  Zero pad is exact: the 1/HW mean scale
    # (folded into w1t below) uses the true HW, and padded outputs are sliced.
    HWp = max(128, pl.cdiv(HW, 128) * 128)
    xf = x.reshape(B, C, HW)
    if HWp != HW:
        xf = jnp.pad(xf, ((0, 0), (0, 0), (0, HWp - HW)))

    # Fold the 1/HW of the mean into w1 once at trace time and pre-transpose
    # both weights so the in-kernel matmuls are row-major (BB, C) @ (C, Cr).
    w1t = (w1.astype(jnp.float32) / jnp.float32(HW)).T        # (C, Cr)
    w2t = w2.astype(jnp.float32).T                            # (Cr, C)

    vmem_bytes, _ = _tpu_chip_info()
    budget = _block_budget_bytes(vmem_bytes)
    per_image = C * HWp * itemsize

    if force_two_pass or per_image > budget:
        out = _ca_two_pass(xf, w1t, w2t)
    else:
        out = _ca_fused(xf, w1t, w2t, alias_input=alias_input)

    if HWp != HW:
        out = out[:, :, :HW]
    return out.reshape(B, C, H, W)


def ca_layer_ref(x, w1, w2):
    # Pure-JAX reference matching the PyTorch forward.
    pooled = jnp.mean(x, axis=(2, 3))                         # (B, C)
    h = jnp.maximum(pooled @ w1.T, 0.0)                       # (B, Cr)
    y = jax.nn.sigmoid(h @ w2.T)                              # (B, C)
    return x * y[:, :, None, None]


if __name__ == "__main__":
    key = jax.random.PRNGKey(0)

    def run_case(B, C, H, W, reduction, **kw):
        Cr = max(C // reduction, 1)
        kx, k1, k2 = jax.random.split(jax.random.fold_in(key, 7 * B + H), 3)
        x = jax.random.normal(kx, (B, C, H, W), dtype=jnp.float32)
        w1 = jax.random.normal(k1, (Cr, C), dtype=jnp.float32) * (1.0 / C) ** 0.5
        w2 = jax.random.normal(k2, (C, Cr), dtype=jnp.float32) * (1.0 / Cr) ** 0.5
        out = jax.block_until_ready(ca_layer(x, w1, w2, **kw))
        ref = ca_layer_ref(x, w1, w2)
        assert out.shape == x.shape
        assert jnp.allclose(out, ref, atol=1e-5, rtol=1e-5), (B, C, H, W, kw)

    # Fused single-pass path: CALayer(channel=32, reduction=4), B=2, 16x16.
    run_case(2, 32, 16, 16, 4)
    # Odd spatial size (exercises lane padding) and a batch that does not
    # divide evenly into the per-step block on multi-core chips.
    run_case(3, 32, 15, 15, 4)
    # Large-HW fallback path (forced at a small shape to test both kernels).
    run_case(2, 32, 16, 16, 4, force_two_pass=True)

    print("KERNEL_OK")
</pallas_src>

<mosaic_0001>
module attributes {stable_mosaic.version = 11 : i64} {
  func.func @_ca_fused_kernel(%arg0: i32, %arg1: memref<2x32x256xf32, #tpu.memory_space<vmem>>, %arg2: memref<32x8xf32, #tpu.memory_space<vmem>>, %arg3: memref<8x32xf32, #tpu.memory_space<vmem>>, %arg4: memref<2x32x256xf32, #tpu.memory_space<vmem>>) attributes {dimension_semantics = [#tpu.dimension_semantics<parallel>], iteration_bounds = array<i64: 1>, scalar_prefetch = 0 : i64, scratch_operands = 0 : i64, tpu.core_type = #tpu.core_type<tc>, window_params = [{transform_indices = @transform_0, window_bounds = array<i64: 2, 32, 256>}, {pipeline_mode = #tpu.pipeline_mode<synchronous>, transform_indices = @transform_1, window_bounds = array<i64: 32, 8>}, {pipeline_mode = #tpu.pipeline_mode<synchronous>, transform_indices = @transform_2, window_bounds = array<i64: 8, 32>}, {transform_indices = @transform_3, window_bounds = array<i64: 2, 32, 256>}]} {
    %c0 = arith.constant 0 : index
    %c0_0 = arith.constant 0 : index
    %c0_1 = arith.constant 0 : index
    %0 = vector.load %arg1[%c0, %c0_0, %c0_1] : memref<2x32x256xf32, #tpu.memory_space<vmem>>, vector<2x32x256xf32>
    %cst = arith.constant dense<0.000000e+00> : vector<2x32xf32>
    %1 = vector.multi_reduction <add>, %0, %cst [2] : vector<2x32x256xf32> to vector<2x32xf32>
    %c0_2 = arith.constant 0 : index
    %c0_3 = arith.constant 0 : index
    %2 = vector.load %arg2[%c0_2, %c0_3] : memref<32x8xf32, #tpu.memory_space<vmem>>, vector<32x8xf32>
    %cst_4 = arith.constant dense<0.000000e+00> : vector<2x8xf32>
    %3 = tpu.matmul %1, %2, %cst_4 {dimension_numbers = #tpu.dot_dimension_numbers<[1], [0], [0], [1], [0, 0, 1, 1], [], []>} : vector<2x32xf32>, vector<32x8xf32>, vector<2x8xf32> -> vector<2x8xf32>
    %cst_5 = arith.constant 0.000000e+00 : f32
    %4 = vector.broadcast %cst_5 : f32 to vector<2x8xf32>
    %5 = arith.maximumf %3, %4 : vector<2x8xf32>
    %c0_6 = arith.constant 0 : index
    %c0_7 = arith.constant 0 : index
    %6 = vector.load %arg3[%c0_6, %c0_7] : memref<8x32xf32, #tpu.memory_space<vmem>>, vector<8x32xf32>
    %cst_8 = arith.constant dense<0.000000e+00> : vector<2x32xf32>
    %7 = tpu.matmul %5, %6, %cst_8 {dimension_numbers = #tpu.dot_dimension_numbers<[1], [0], [0], [1], [0, 0, 1, 1], [], []>} : vector<2x8xf32>, vector<8x32xf32>, vector<2x32xf32> -> vector<2x32xf32>
    %8 = arith.negf %7 : vector<2x32xf32>
    %9 = math.exp %8 : vector<2x32xf32>
    %cst_9 = arith.constant 1.000000e+00 : f32
    %10 = vector.broadcast %cst_9 : f32 to vector<2x32xf32>
    %11 = arith.addf %10, %9 : vector<2x32xf32>
    %12 = arith.divf %10, %11 : vector<2x32xf32>
    %c0_10 = arith.constant 0 : index
    %c0_11 = arith.constant 0 : index
    %c0_12 = arith.constant 0 : index
    %13 = vector.load %arg1[%c0_10, %c0_11, %c0_12] : memref<2x32x256xf32, #tpu.memory_space<vmem>>, vector<2x32x256xf32>
    %14 = vector.shape_cast %12 : vector<2x32xf32> to vector<2x32x1xf32>
    %15 = vector.broadcast %14 : vector<2x32x1xf32> to vector<2x32x256xf32>
    %16 = arith.mulf %13, %15 : vector<2x32x256xf32>
    %c0_13 = arith.constant 0 : index
    %c0_14 = arith.constant 0 : index
    %c0_15 = arith.constant 0 : index
    %17 = vector.load %arg4[%c0_13, %c0_14, %c0_15] : memref<2x32x256xf32, #tpu.memory_space<vmem>>, vector<2x32x256xf32>
    tpu.vector_store %arg4[%c0_13, %c0_14, %c0_15], %16 {strides = array<i32>} : memref<2x32x256xf32, #tpu.memory_space<vmem>>, vector<2x32x256xf32>,
    return
  }
  func.func @transform_0(%arg0: i32) -> (i32, i32, i32) {
    %c0_i32 = arith.constant 0 : i32
    %c0_i32_0 = arith.constant 0 : i32
    %c0_i32_1 = arith.constant 0 : i32
    return %arg0, %c0_i32, %c0_i32_0 : i32, i32, i32
  }
  func.func @transform_1(%arg0: i32) -> (i32, i32) {
    %c0_i32 = arith.constant 0 : i32
    %c0_i32_0 = arith.constant 0 : i32
    %c0_i32_1 = arith.constant 0 : i32
    return %c0_i32, %c0_i32_0 : i32, i32
  }
  func.func @transform_2(%arg0: i32) -> (i32, i32) {
    %c0_i32 = arith.constant 0 : i32
    %c0_i32_0 = arith.constant 0 : i32
    %c0_i32_1 = arith.constant 0 : i32
    return %c0_i32, %c0_i32_0 : i32, i32
  }
  func.func @transform_3(%arg0: i32) -> (i32, i32, i32) {
    %c0_i32 = arith.constant 0 : i32
    %c0_i32_0 = arith.constant 0 : i32
    %c0_i32_1 = arith.constant 0 : i32
    return %arg0, %c0_i32, %c0_i32_0 : i32, i32, i32
  }
}

</mosaic_0001>

<llo_original>
// kernel: tpu_custom_call.1
$region0: #{tpu_custom_call.1}
  #allocation0 [shape = 'u32[]', space=smem, size = 0x4, offset = 0x4, fixed_abs, tag = 'smem constant byte address 0x4 - core index']
  #allocation1 [shape = 'u32[144,128]{1,0:T(1,128)}', space=vmem, size = 0x12000, scoped, tag = 'internal scratch']
  %s0 = inlined_call_operand.hbm [shape: f32[2,32,256], index: 0, kind: input, shape index: {}]
  %s1 = inlined_call_operand.vmem [shape: f32[32,8], index: 1, kind: input, shape index: {}]
  %s2 = inlined_call_operand.vmem [shape: f32[8,32], index: 2, kind: input, shape index: {}]
  %s3 = inlined_call_operand.hbm [shape: f32[2,32,256], index: 3, kind: output, shape index: {}]
  %s4 = sld [smem:[#allocation0]]
  $region26: #{tpu_custom_call.1} parent=0
    _
  %s6 = ssub.s32 1, %s4
  %s7 = scalar_select 0, %s6, %s4
  $region1: #{tpu_custom_call.1} parent=0
    #allocation2 [shape = 'u8[65536]{0}', space=vmem, size = 0x10000, scoped, tag = 'input window, operand 0, single buffered']
    #allocation3 [shape = 's32[1]{0}', space=sflag, size = 0x4, scoped, tag = 'scoped memory for tpu_custom_call.1']
    #allocation4 [shape = 's32[1]{0}', space=sflag, size = 0x4, scoped, tag = 'scoped memory for tpu_custom_call.1']
    #allocation5 [shape = 'u8[65536]{0}', space=vmem, size = 0x10000, scoped, tag = 'output window, operand 0, single buffered']
    %8 = vsyncpa [#allocation3], 0
    %9 = vsyncpa [#allocation4], 0
    // Predicated region
    $region2: #{tpu_custom_call.1} parent=1 // pred_check
      _
    $region3: #{tpu_custom_call.1} parent=1 // pred_check_branch
      %11 = sbr.rel (0) target = $region5
    $region4: #{tpu_custom_call.1} parent=1 // pred_region
      %s13 = ssub.s32 2048, 2048
      %14 = vsyncadd [#allocation3], %s13
      %s15 = sshll.u32 [#allocation2], 4
      %s16 = int_to_ptr.vmem [resolvable:$true] %s15
      %21 = dma.hbm_to_vmem [thread:$0]  %s0, 2048, %s16, [#allocation3], 256, 256, 16
    $region5: #{tpu_custom_call.1} parent=1 // pred_fallthru
      _
    // Predicated region
    $region6: #{tpu_custom_call.1} parent=1 // pred_check
      _
    $region7: #{tpu_custom_call.1} parent=1 // pred_check_branch
      %23 = sbr.rel (0) target = $region9
    $region8: #{tpu_custom_call.1} parent=1 // pred_region
      _
    $region9: #{tpu_custom_call.1} parent=1 // pred_fallthru
      _
    // Predicated region
    $region10: #{tpu_custom_call.1} parent=1 // pred_check
      _
    $region11: #{tpu_custom_call.1} parent=1 // pred_check_branch
      %25 = sbr.rel (0) target = $region13
    $region12: #{tpu_custom_call.1} parent=1 // pred_region
      _
    $region13: #{tpu_custom_call.1} parent=1 // pred_fallthru
      _
    // Predicated region
    $region14: #{tpu_custom_call.1} parent=1 // pred_check
      _
    $region15: #{tpu_custom_call.1} parent=1 // pred_check_branch
      %27 = sbr.rel (0) target = $region17
    $region16: #{tpu_custom_call.1} parent=1 // pred_region
      %28 = dma.done [#allocation3], 2048
    $region17: #{tpu_custom_call.1} parent=1 // pred_fallthru
      _
    %v29 = vld [vmem:[#allocation2] sm:$0xff]
    %v30 = vld [vmem:[#allocation2 + $0x8] sm:$0xff]
    %v31 = vld [vmem:[#allocation2 + $0x10] sm:$0xff]
    %v32 = vld [vmem:[#allocation2 + $0x18] sm:$0xff]
    %v33 = vld [vmem:[#allocation2 + $0x20] sm:$0xff]
    %v34 = vld [vmem:[#allocation2 + $0x28] sm:$0xff]
    %v35 = vld [vmem:[#allocation2 + $0x30] sm:$0xff]
    %v36 = vld [vmem:[#allocation2 + $0x38] sm:$0xff]
    %v37 = vld [vmem:[#allocation2 + $0x40] sm:$0xff]
    %v38 = vld [vmem:[#allocation2 + $0x48] sm:$0xff]
    %v39 = vld [vmem:[#allocation2 + $0x50] sm:$0xff]
    %v40 = vld [vmem:[#allocation2 + $0x58] sm:$0xff]
    %v41 = vld [vmem:[#allocation2 + $0x60] sm:$0xff]
    %v42 = vld [vmem:[#allocation2 + $0x68] sm:$0xff]
    %v43 = vld [vmem:[#allocation2 + $0x70] sm:$0xff]
    %v44 = vld [vmem:[#allocation2 + $0x78] sm:$0xff]
    %v45 = vadd.f32 %v29, %v30
    %46 = vadd.xlane.f32.xlu0 %v45
    %v47 = vpop.xlane.xlu0 %46
    %v48 = vadd.f32 %v31, %v32
    %49 = vadd.xlane.f32.xlu0 %v48
    %v50 = vpop.xlane.xlu0 %49
    %v51 = vadd.f32 %v33, %v34
    %52 = vadd.xlane.f32.xlu0 %v51
    %v53 = vpop.xlane.xlu0 %52
    %v54 = vadd.f32 %v35, %v36
    %55 = vadd.xlane.f32.xlu0 %v54
    %v56 = vpop.xlane.xlu0 %55
    %v57 = vadd.f32 %v37, %v38
    %58 = vadd.xlane.f32.xlu0 %v57
    %v59 = vpop.xlane.xlu0 %58
    %v60 = vadd.f32 %v39, %v40
    %61 = vadd.xlane.f32.xlu0 %v60
    %v62 = vpop.xlane.xlu0 %61
    %v63 = vadd.f32 %v41, %v42
    %64 = vadd.xlane.f32.xlu0 %v63
    %v65 = vpop.xlane.xlu0 %64
    %v66 = vadd.f32 %v43, %v44
    %67 = vadd.xlane.f32.xlu0 %v66
    %v68 = vpop.xlane.xlu0 %67
    %v69 = vld [vmem:[%s1] sm:$0xff]
    %v70 = vld [vmem:[%s1 + $0x8] sm:$0xff]
    %v71 = vld [vmem:[%s1 + $0x10] sm:$0xff]
    %v72 = vld [vmem:[%s1 + $0x18] sm:$0xff]
    %v81 = vlaneseq
    %v82 = vand.u32 %v81, 127
    %v83 = vlaneseq
    %v84 = vshrl.u32 %v83, 7
    %v85 = vsub.s32 %v82, %v84
    %v86 = vrot.slane %v47, %v85
    %v87 = vadd.s32 %v82, 4294967288
    %v88 = vlaneseq
    %v89 = vshrl.u32 %v88, 7
    %v90 = vsub.s32 %v87, %v89
    %v91 = vrot.slane %v50, %v90
    %vm92 = vcmask 130112
    %v93 = vsel %vm92, %v91, %v86
    %v94 = vadd.s32 %v82, 4294967280
    %v95 = vlaneseq
    %v96 = vshrl.u32 %v95, 7
    %v97 = vsub.s32 %v94, %v96
    %v98 = vrot.slane %v53, %v97
    %vm99 = vcmask 195712
    %v100 = vsel %vm99, %v98, %v93
    %v101 = vadd.s32 %v82, 4294967272
    %v102 = vlaneseq
    %v103 = vshrl.u32 %v102, 7
    %v104 = vsub.s32 %v101, %v103
    %v105 = vrot.slane %v56, %v104
    %vm106 = vcmask 261312
    %v107 = vsel %vm106, %v105, %v100
    %v108 = vlaneseq
    %v109 = vshrl.u32 %v108, 7
    %v110 = vsub.s32 %v82, %v109
    %v111 = vrot.slane %v59, %v110
    %v112 = vlaneseq
    %v113 = vshrl.u32 %v112, 7
    %v114 = vsub.s32 %v87, %v113
    %v115 = vrot.slane %v62, %v114
    %v116 = vsel %vm92, %v115, %v111
    %v117 = vlaneseq
    %v118 = vshrl.u32 %v117, 7
    %v119 = vsub.s32 %v94, %v118
    %v120 = vrot.slane %v65, %v119
    %v121 = vsel %vm99, %v120, %v116
    %v122 = vlaneseq
    %v123 = vshrl.u32 %v122, 7
    %v124 = vsub.s32 %v101, %v123
    %v125 = vrot.slane %v68, %v124
    %v126 = vsel %vm106, %v125, %v121
    %vm127 = vcmask 1041409
    %v128 = vsel %vm127, %v126, %v107
    %vm129 = vcmask 261120
    %v130 = vsel %vm129, %v128, 0
    %132 = vmatprep.subr.mxu0 0.0
    %133 = vmatpush1.msra.mxu0 %v69
    %134 = vmatprep.subr.mxu0 0.0
    %135 = vmatpush1.msra.mxu0 %v70
    %136 = vmatprep.subr.mxu0 0.0
    %137 = vmatpush1.msra.mxu0 %v71
    %138 = vmatprep.subr.mxu0 0.0
    %139 = vmatpush1.msra.mxu0 %v72
    %140 = vmatprep.subr.mxu0 0.0
    %141 = vmatpush1.msra.mxu0 0.0
    %142 = vmatprep.subr.mxu0 0.0
    %143 = vmatpush1.msra.mxu0 0.0
    %144 = vmatprep.subr.mxu0 0.0
    %145 = vmatpush1.msra.mxu0 0.0
    %146 = vmatprep.subr.mxu0 0.0
    %147 = vmatpush1.msra.mxu0 0.0
    %148 = vmatprep.subr.mxu0 0.0
    %149 = vmatpush1.msra.mxu0 0.0
    %150 = vmatprep.subr.mxu0 0.0
    %151 = vmatpush1.msra.mxu0 0.0
    %152 = vmatprep.subr.mxu0 0.0
    %153 = vmatpush1.msra.mxu0 0.0
    %154 = vmatprep.subr.mxu0 0.0
    %155 = vmatpush1.msra.mxu0 0.0
    %156 = vmatprep.subr.mxu0 0.0
    %157 = vmatpush1.msra.mxu0 0.0
    %158 = vmatprep.subr.mxu0 0.0
    %159 = vmatpush1.msra.mxu0 0.0
    %160 = vmatprep.subr.mxu0 0.0
    %161 = vmatpush1.msra.mxu0 0.0
    %162 = vmatprep.subr.mxu0 0.0
    %163 = vmatpush1.msra.mxu0 0.0
    %164 = vmatprep.subr.mxu0 0.0
    %165 = vmatpush1.msra.mxu0 0.0
    %166 = vmatprep.subr.mxu0 0.0
    %167 = vmatpush1.msra.mxu0 0.0
    %168 = vmatprep.subr.mxu0 0.0
    %169 = vmatpush1.msra.mxu0 0.0
    %170 = vmatprep.subr.mxu0 0.0
    %171 = vmatpush1.msra.mxu0 0.0
    %172 = vmatprep.subr.mxu0 0.0
    %173 = vmatpush1.msra.mxu0 0.0
    %174 = vmatprep.subr.mxu0 0.0
    %175 = vmatpush1.msra.mxu0 0.0
    %176 = vmatprep.subr.mxu0 0.0
    %177 = vmatpush1.msra.mxu0 0.0
    %178 = vmatprep.subr.mxu0 0.0
    %179 = vmatpush1.msra.mxu0 0.0
    %180 = vmatprep.subr.mxu0 0.0
    %181 = vmatpush1.msra.mxu0 0.0
    %182 = vmatprep.subr.mxu0 0.0
    %183 = vmatpush1.msra.mxu0 0.0
    %184 = vmatprep.subr.mxu0 0.0
    %185 = vmatpush1.msra.mxu0 0.0
    %186 = vmatprep.subr.mxu0 0.0
    %187 = vmatpush1.msra.mxu0 0.0
    %188 = vmatprep.subr.mxu0 0.0
    %189 = vmatpush1.msra.mxu0 0.0
    %190 = vmatprep.subr.mxu0 0.0
    %191 = vmatpush1.msra.mxu0 0.0
    %192 = vmatprep.subr.mxu0 0.0
    %193 = vmatpush1.msra.mxu0 0.0
    %194 = vmatprep.subr.mxu0 0.0
    %195 = vmatpush1.msra.mxu0 0.0
    %196 = vmatprep.mubr.f32.mxu0 0.0
    %197 = vmatmul.mubr.f32.gmra.mrb[0].mxu0 %v130
    %v198 = vpop.f32.mrb[0].mxu0
    %v199 = vadd.f32 0.0, %v198
    %v200 = vpop.f32.mrb[0].mxu0
    %201 = vdwg.mxu0
    %v202 = vmax.f32 %v199, 0.0
    %v203 = vld [vmem:[%s2] sm:$0xff]
    %vm204 = vcmask 64512
    %v206 = vsel %vm204, %v202, 0
    %208 = vmatprep.subr.mxu0 0.0
    %209 = vmatpush1.msra.mxu0 %v203
    %210 = vmatprep.subr.mxu0 0.0
    %211 = vmatpush1.msra.mxu0 0.0
    %212 = vmatprep.subr.mxu0 0.0
    %213 = vmatpush1.msra.mxu0 0.0
    %214 = vmatprep.subr.mxu0 0.0
    %215 = vmatpush1.msra.mxu0 0.0
    %216 = vmatprep.subr.mxu0 0.0
    %217 = vmatpush1.msra.mxu0 0.0
    %218 = vmatprep.subr.mxu0 0.0
    %219 = vmatpush1.msra.mxu0 0.0
    %220 = vmatprep.subr.mxu0 0.0
    %221 = vmatpush1.msra.mxu0 0.0
    %222 = vmatprep.subr.mxu0 0.0
    %223 = vmatpush1.msra.mxu0 0.0
    %224 = vmatprep.subr.mxu0 0.0
    %225 = vmatpush1.msra.mxu0 0.0
    %226 = vmatprep.subr.mxu0 0.0
    %227 = vmatpush1.msra.mxu0 0.0
    %228 = vmatprep.subr.mxu0 0.0
    %229 = vmatpush1.msra.mxu0 0.0
    %230 = vmatprep.subr.mxu0 0.0
    %231 = vmatpush1.msra.mxu0 0.0
    %232 = vmatprep.subr.mxu0 0.0
    %233 = vmatpush1.msra.mxu0 0.0
    %234 = vmatprep.subr.mxu0 0.0
    %235 = vmatpush1.msra.mxu0 0.0
    %236 = vmatprep.subr.mxu0 0.0
    %237 = vmatpush1.msra.mxu0 0.0
    %238 = vmatprep.subr.mxu0 0.0
    %239 = vmatpush1.msra.mxu0 0.0
    %240 = vmatprep.subr.mxu0 0.0
    %241 = vmatpush1.msra.mxu0 0.0
    %242 = vmatprep.subr.mxu0 0.0
    %243 = vmatpush1.msra.mxu0 0.0
    %244 = vmatprep.subr.mxu0 0.0
    %245 = vmatpush1.msra.mxu0 0.0
    %246 = vmatprep.subr.mxu0 0.0
    %247 = vmatpush1.msra.mxu0 0.0
    %248 = vmatprep.subr.mxu0 0.0
    %249 = vmatpush1.msra.mxu0 0.0
    %250 = vmatprep.subr.mxu0 0.0
    %251 = vmatpush1.msra.mxu0 0.0
    %252 = vmatprep.subr.mxu0 0.0
    %253 = vmatpush1.msra.mxu0 0.0
    %254 = vmatprep.subr.mxu0 0.0
    %255 = vmatpush1.msra.mxu0 0.0
    %256 = vmatprep.subr.mxu0 0.0
    %257 = vmatpush1.msra.mxu0 0.0
    %258 = vmatprep.subr.mxu0 0.0
    %259 = vmatpush1.msra.mxu0 0.0
    %260 = vmatprep.subr.mxu0 0.0
    %261 = vmatpush1.msra.mxu0 0.0
    %262 = vmatprep.subr.mxu0 0.0
    %263 = vmatpush1.msra.mxu0 0.0
    %264 = vmatprep.subr.mxu0 0.0
    %265 = vmatpush1.msra.mxu0 0.0
    %266 = vmatprep.subr.mxu0 0.0
    %267 = vmatpush1.msra.mxu0 0.0
    %268 = vmatprep.subr.mxu0 0.0
    %269 = vmatpush1.msra.mxu0 0.0
    %270 = vmatprep.subr.mxu0 0.0
    %271 = vmatpush1.msra.mxu0 0.0
    %272 = vmatprep.mubr.f32.mxu0 0.0
    %273 = vmatmul.mubr.f32.gmra.mrb[0].mxu0 %v206
    %v274 = vpop.f32.mrb[0].mxu0
    %v275 = vadd.f32 0.0, %v274
    %v276 = vpop.f32.mrb[0].mxu0
    %277 = vdwg.mxu0
    %v278 = vxor.u32 %v275, 2147483648
    %v279 = vmul.f32 %v278, 1.442695
    %v280 = vpow.pop %v279
    %v281 = vadd.f32 %v280, 1.0
    %v282 = vrcp.pop %v281
    %v283 = vmul.f32 1.0, %v282
    %v284 = vlaneseq
    %v285 = vshrl.u32 %v284, 7
    %v286 = vsub.s32 0, %v285
    %v287 = vrot.slane %v283, %v286
    %289 = vbcast.lane.b32.xlu0 %v287, 256
    %v290 = vpop.permute.xlu0 %289
    %s292 = sor.u32 256, 8
    %293 = vbcast.lane.b32.xlu0 %v287, %s292
    %v294 = vpop.permute.xlu0 %293
    %s296 = sor.u32 256, 16
    %297 = vbcast.lane.b32.xlu0 %v287, %s296
    %v298 = vpop.permute.xlu0 %297
    %s300 = sor.u32 256, 24
    %301 = vbcast.lane.b32.xlu0 %v287, %s300
    %v302 = vpop.permute.xlu0 %301
    %v303 = vlaneseq
    %v304 = vshrl.u32 %v303, 7
    %v305 = vsub.s32 1, %v304
    %v306 = vrot.slane %v283, %v305
    %308 = vbcast.lane.b32.xlu0 %v306, 256
    %v309 = vpop.permute.xlu0 %308
    %s311 = sor.u32 256, 8
    %312 = vbcast.lane.b32.xlu0 %v306, %s311
    %v313 = vpop.permute.xlu0 %312
    %s315 = sor.u32 256, 16
    %316 = vbcast.lane.b32.xlu0 %v306, %s315
    %v317 = vpop.permute.xlu0 %316
    %s319 = sor.u32 256, 24
    %320 = vbcast.lane.b32.xlu0 %v306, %s319
    %v321 = vpop.permute.xlu0 %320
    %v322 = vmul.f32 %v29, %v290
    %v323 = vmul.f32 %v30, %v290
    %v324 = vmul.f32 %v31, %v294
    %v325 = vmul.f32 %v32, %v294
    %v326 = vmul.f32 %v33, %v298
    %v327 = vmul.f32 %v34, %v298
    %v328 = vmul.f32 %v35, %v302
    %v329 = vmul.f32 %v36, %v302
    %v330 = vmul.f32 %v37, %v309
    %v331 = vmul.f32 %v38, %v309
    %v332 = vmul.f32 %v39, %v313
    %v333 = vmul.f32 %v40, %v313
    %v334 = vmul.f32 %v41, %v317
    %v335 = vmul.f32 %v42, %v317
    %v336 = vmul.f32 %v43, %v321
    %v337 = vmul.f32 %v44, %v321
    %338 = vst [vmem:[#allocation5] sm:$0xff] %v322
    %339 = vst [vmem:[#allocation5 + $0x8] sm:$0xff] %v323
    %340 = vst [vmem:[#allocation5 + $0x10] sm:$0xff] %v324
    %341 = vst [vmem:[#allocation5 + $0x18] sm:$0xff] %v325
    %342 = vst [vmem:[#allocation5 + $0x20] sm:$0xff] %v326
    %343 = vst [vmem:[#allocation5 + $0x28] sm:$0xff] %v327
    %344 = vst [vmem:[#allocation5 + $0x30] sm:$0xff] %v328
    %345 = vst [vmem:[#allocation5 + $0x38] sm:$0xff] %v329
    %346 = vst [vmem:[#allocation5 + $0x40] sm:$0xff] %v330
    %347 = vst [vmem:[#allocation5 + $0x48] sm:$0xff] %v331
    %348 = vst [vmem:[#allocation5 + $0x50] sm:$0xff] %v332
    %349 = vst [vmem:[#allocation5 + $0x58] sm:$0xff] %v333
    %350 = vst [vmem:[#allocation5 + $0x60] sm:$0xff] %v334
    %351 = vst [vmem:[#allocation5 + $0x68] sm:$0xff] %v335
    %352 = vst [vmem:[#allocation5 + $0x70] sm:$0xff] %v336
    %353 = vst [vmem:[#allocation5 + $0x78] sm:$0xff] %v337
    // Predicated region
    $region18: #{tpu_custom_call.1} parent=1 // pred_check
      _
    $region19: #{tpu_custom_call.1} parent=1 // pred_check_branch
      %355 = sbr.rel (0) target = $region21
    $region20: #{tpu_custom_call.1} parent=1 // pred_region
      %s357 = ssub.s32 2048, 2048
      %358 = vsyncadd [#allocation4], %s357
      %s359 = sshll.u32 [#allocation5], 4
      %s360 = int_to_ptr.vmem [resolvable:$true] %s359
      %365 = dma.vmem_to_hbm [thread:$0]  %s360, 2048, %s3, [#allocation4], 256, 256, 16
    $region21: #{tpu_custom_call.1} parent=1 // pred_fallthru
      _
    // Predicated region
    $region22: #{tpu_custom_call.1} parent=1 // pred_check
      _
    $region23: #{tpu_custom_call.1} parent=1 // pred_check_branch
      %367 = sbr.rel (0) target = $region25
    $region24: #{tpu_custom_call.1} parent=1 // pred_region
      %368 = dma.done [#allocation4], 2048
    $region25: #{tpu_custom_call.1} parent=1 // pred_fallthru
      _
    %369 = vsyncpa [#allocation3], 1
    %370 = vsyncpa [#allocation4], 1

</llo_original>
